<compile_context>
chip_gen: v5e
topology: v5e:2x2
jax: 0.10.0
libtpu: 0.0.40
codegen_flags: <defaults>
</compile_context>

<pallas_src>
import jax
import jax.numpy as jnp
from jax.experimental import pallas as pl
from jax.experimental.pallas import tpu as pltpu


def _round_up(x, m):
    return ((x + m - 1) // m) * m


def _cdiv(a, b):
    return (a + b - 1) // b


def _vmem_budget_bytes():
    """Per-generation VMEM budget (leaves headroom for Mosaic scratch)."""
    try:
        cap = pltpu.get_tpu_info().vmem_capacity_bytes
    except Exception:
        cap = 64 * 1024 * 1024  # conservative default (v7x-sized)
    if cap >= 96 * 1024 * 1024:
        return 100 * 1024 * 1024  # v5e / v6e (128 MiB physical)
    return 48 * 1024 * 1024       # v7x (64 MiB physical)


def _choose_tm(M, tm_max):
    """Row-tile size: full-dim block for small M, else even tile count."""
    if M <= tm_max:
        return M  # single full-dim row block (always a legal block shape)
    TM = (tm_max // 8) * 8
    n_m = _cdiv(M, TM)
    if n_m % 2 == 1:
        # Keep an even number of row tiles so v7x's two TensorCores balance.
        TM = _round_up(_cdiv(M, n_m + 1), 8)
    return TM


def _linear_kernel(x_ref, w_ref, b_ref, o_ref):
    # x_ref: (TM, K)   w_ref: (K, TN)   b_ref: (1, TN)   o_ref: (TM, TN)
    acc = jnp.dot(x_ref[...], w_ref[...], preferred_element_type=jnp.float32)
    o_ref[...] = (acc + b_ref[...]).astype(o_ref.dtype)


def linear_pallas(x2d, weight, bias, *, tm_max=512, compute_dtype=None):
    """y = x2d @ weight.T + bias via a tiled Pallas TPU kernel.

    x2d:    (M, K)  float32
    weight: (N, K)  float32  (PyTorch nn.Linear layout)
    bias:   (N,)    float32
    compute_dtype: optional (e.g. jnp.bfloat16) for x / weight; accumulation
                   is always f32 and the output keeps x2d.dtype.
    returns (M, N) in x2d.dtype
    """
    M, K = x2d.shape
    N = weight.shape[0]
    out_dtype = x2d.dtype

    cdt = compute_dtype if compute_dtype is not None else x2d.dtype
    in_bytes = jnp.dtype(cdt).itemsize
    out_bytes = jnp.dtype(out_dtype).itemsize

    # --- N padding policy (lane-dense only when it is nearly free) ---
    if N % 128 == 0:
        N_out = N                       # already lane-dense
    elif N >= 64:
        N_out = _round_up(N, 128)       # close to a lane: pad, unmasked stores
    else:
        N_out = N                       # tiny n_tags: masked stores, no slice

    # --- weight pre-transpose (once, grid-invariant) + optional padding ---
    w_t = weight.T                                    # (K, N)
    b_row = bias
    if N_out != N:
        w_t = jnp.pad(w_t, ((0, 0), (0, N_out - N)))
        b_row = jnp.pad(b_row, (0, N_out - N))
    b_row = b_row.reshape(1, N_out).astype(jnp.float32)

    if x2d.dtype != cdt:
        x2d = x2d.astype(cdt)
    if w_t.dtype != cdt:
        w_t = w_t.astype(cdt)

    # --- tile sizes derived from a per-generation VMEM budget ---
    TM = _choose_tm(M, tm_max)
    budget = _vmem_budget_bytes()

    def needed(tm, tn):
        # Double-buffered x / out blocks, plus (conservatively double-counted)
        # resident weight / bias blocks.
        return 2 * (tm * K * in_bytes + K * tn * in_bytes
                    + tn * 4 + tm * tn * out_bytes)

    TN = N_out
    while needed(TM, TN) > budget and N_out % 128 == 0 and TN > 256:
        TN = max(256, _round_up(TN // 2, 128))
    while needed(TM, TN) > budget:
        new_tm = max(64, _round_up(TM // 2, 8))
        if new_tm == TM:
            break
        TM = new_tm
    # TODO(synk): if a single (TM=64, TN=256) working set still exceeds the
    # budget (enormous utt_size K), a K-tiled reduction axis would be needed.

    n_m = _cdiv(M, TM)
    n_n = _cdiv(N_out, TN)

    # Never request the full physical VMEM; derive from the blocks + margin.
    vmem_limit = int(min(budget, max(2 * needed(TM, TN) + (4 << 20), 32 << 20)))

    out = pl.pallas_call(
        _linear_kernel,
        out_shape=jax.ShapeDtypeStruct((M, N_out), out_dtype),
        grid=(n_m, n_n),
        in_specs=[
            pl.BlockSpec((TM, K), lambda i, j: (i, 0)),   # x rows (pipelined)
            pl.BlockSpec((K, TN), lambda i, j: (0, j)),   # weight cols
            pl.BlockSpec((1, TN), lambda i, j: (0, j)),   # bias cols
        ],
        out_specs=pl.BlockSpec((TM, TN), lambda i, j: (i, j)),
        compiler_params=pltpu.CompilerParams(
            dimension_semantics=("parallel", "parallel"),
            vmem_limit_bytes=vmem_limit,
        ),
        cost_estimate=pl.CostEstimate(
            flops=2 * M * K * N_out,
            transcendentals=0,
            bytes_accessed=(M * K * in_bytes + K * N_out * in_bytes
                            + 4 * N_out + M * N_out * out_bytes),
        ),
    )(x2d, w_t, b_row)

    return out if N_out == N else out[:, :N]


def simple_darrnn_forward(x, hidden, weight, bias, *, force_pallas=False,
                          compute_dtype=None):
    """Forward pass of SimpleDARRNN.

    x:      (d0, d1, utt_size)
    hidden: passed through unchanged (init_hidden returns an empty tensor)
    """
    d0, d1, utt_size = x.shape
    M = d0 * d1
    N = weight.shape[0]
    x2d = x.reshape(M, utt_size)
    # Small-problem fallback: pallas_call launch + pipeline setup (~us)
    # dominates for tiny tensors; a plain fused XLA dot is strictly faster.
    if not force_pallas and 2 * M * utt_size * N < (1 << 20):
        decoded = x2d @ weight.T + bias
    else:
        decoded = linear_pallas(x2d, weight, bias, compute_dtype=compute_dtype)
    return decoded.reshape(d0, d1, decoded.shape[1]), hidden


if __name__ == "__main__":
    # Small, forward-implied shapes: seq=8, batch=2, utt_size=32, n_tags=16
    seq, batch, utt_size, n_tags = 8, 2, 32, 16

    key = jax.random.PRNGKey(0)
    kx, kw, kb = jax.random.split(key, 3)

    x = jax.random.normal(kx, (seq, batch, utt_size), dtype=jnp.float32)
    # PyTorch layout: weight (n_tags, utt_size), bias (n_tags,)
    weight = jax.random.normal(kw, (n_tags, utt_size), dtype=jnp.float32) * 0.1
    bias = jax.random.normal(kb, (n_tags,), dtype=jnp.float32) * 0.1
    hidden = jnp.zeros((0,), dtype=jnp.float32)  # init_hidden -> empty tensor

    # force_pallas so the tiny demo actually exercises the kernel path.
    out, h_out = simple_darrnn_forward(x, hidden, weight, bias,
                                       force_pallas=True)
    jax.block_until_ready(out)

    ref = (x.reshape(seq * batch, utt_size) @ weight.T + bias).reshape(
        seq, batch, n_tags)
    assert out.shape == (seq, batch, n_tags)
    assert h_out.shape == hidden.shape
    assert jnp.allclose(out, ref, atol=1e-5, rtol=1e-5)

    # Larger M with a trailing partial row tile (no wrapper M padding / slice),
    # f32 path with tight tolerance.
    M_big = 3000  # not a multiple of the 512-row tile
    xb = jax.random.normal(kx, (M_big, utt_size), dtype=jnp.float32)
    refb = xb @ weight.T + bias
    yb32 = linear_pallas(xb, weight, bias)
    jax.block_until_ready(yb32)
    assert jnp.allclose(yb32, refb, atol=1e-4, rtol=1e-4)

    # Same shape through the bf16-input / f32-accumulation path (looser tol).
    yb16 = linear_pallas(xb, weight, bias, compute_dtype=jnp.bfloat16)
    jax.block_until_ready(yb16)
    assert yb16.dtype == jnp.float32
    assert jnp.allclose(yb16, refb, atol=5e-2, rtol=5e-2)

    print("KERNEL_OK")
</pallas_src>

<mosaic_0001>
module attributes {stable_mosaic.version = 11 : i64} {
  func.func @_linear_kernel(%arg0: i32, %arg1: i32, %arg2: memref<16x32xf32, #tpu.memory_space<vmem>>, %arg3: memref<32x16xf32, #tpu.memory_space<vmem>>, %arg4: memref<1x16xf32, #tpu.memory_space<vmem>>, %arg5: memref<16x16xf32, #tpu.memory_space<vmem>>) attributes {dimension_semantics = [#tpu.dimension_semantics<parallel>, #tpu.dimension_semantics<parallel>], iteration_bounds = array<i64: 1, 1>, scalar_prefetch = 0 : i64, scratch_operands = 0 : i64, tpu.core_type = #tpu.core_type<tc>, window_params = [{transform_indices = @transform_0, window_bounds = array<i64: 16, 32>}, {transform_indices = @transform_1, window_bounds = array<i64: 32, 16>}, {transform_indices = @transform_2, window_bounds = array<i64: 1, 16>}, {transform_indices = @transform_3, window_bounds = array<i64: 16, 16>}]} {
    %c0 = arith.constant 0 : index
    %c0_0 = arith.constant 0 : index
    %0 = vector.load %arg2[%c0, %c0_0] : memref<16x32xf32, #tpu.memory_space<vmem>>, vector<16x32xf32>
    %c0_1 = arith.constant 0 : index
    %c0_2 = arith.constant 0 : index
    %1 = vector.load %arg3[%c0_1, %c0_2] : memref<32x16xf32, #tpu.memory_space<vmem>>, vector<32x16xf32>
    %cst = arith.constant dense<0.000000e+00> : vector<16x16xf32>
    %2 = tpu.matmul %0, %1, %cst {dimension_numbers = #tpu.dot_dimension_numbers<[1], [0], [0], [1], [0, 0, 1, 1], [], []>} : vector<16x32xf32>, vector<32x16xf32>, vector<16x16xf32> -> vector<16x16xf32>
    %c0_3 = arith.constant 0 : index
    %c0_4 = arith.constant 0 : index
    %3 = vector.load %arg4[%c0_3, %c0_4] : memref<1x16xf32, #tpu.memory_space<vmem>>, vector<1x16xf32>
    %4 = vector.broadcast %3 : vector<1x16xf32> to vector<16x16xf32>
    %5 = arith.addf %2, %4 : vector<16x16xf32>
    %c0_5 = arith.constant 0 : index
    %c0_6 = arith.constant 0 : index
    %6 = vector.load %arg5[%c0_5, %c0_6] : memref<16x16xf32, #tpu.memory_space<vmem>>, vector<16x16xf32>
    tpu.vector_store %arg5[%c0_5, %c0_6], %5 {strides = array<i32>} : memref<16x16xf32, #tpu.memory_space<vmem>>, vector<16x16xf32>,
    return
  }
  func.func @transform_0(%arg0: i32, %arg1: i32) -> (i32, i32) {
    %c0_i32 = arith.constant 0 : i32
    %c0_i32_0 = arith.constant 0 : i32
    return %arg0, %c0_i32 : i32, i32
  }
  func.func @transform_1(%arg0: i32, %arg1: i32) -> (i32, i32) {
    %c0_i32 = arith.constant 0 : i32
    %c0_i32_0 = arith.constant 0 : i32
    return %c0_i32, %arg1 : i32, i32
  }
  func.func @transform_2(%arg0: i32, %arg1: i32) -> (i32, i32) {
    %c0_i32 = arith.constant 0 : i32
    %c0_i32_0 = arith.constant 0 : i32
    return %c0_i32, %arg1 : i32, i32
  }
  func.func @transform_3(%arg0: i32, %arg1: i32) -> (i32, i32) {
    %c0_i32 = arith.constant 0 : i32
    return %arg0, %arg1 : i32, i32
  }
}

</mosaic_0001>

<llo_original>
// kernel: tpu_custom_call.1
$region0: #{tpu_custom_call.1}
  #allocation0 [shape = 'u32[]', space=smem, size = 0x4, offset = 0x4, fixed_abs, tag = 'smem constant byte address 0x4 - core index']
  #allocation1 [shape = 'u32[72,128]{1,0:T(1,128)}', space=vmem, size = 0x9000, scoped, tag = 'internal scratch']
  %s0 = inlined_call_operand.vmem [shape: f32[16,32], index: 0, kind: input, shape index: {}]
  %s1 = inlined_call_operand.vmem [shape: f32[32,16], index: 1, kind: input, shape index: {}]
  %s2 = inlined_call_operand.vmem [shape: f32[1,16], index: 2, kind: input, shape index: {}]
  %s3 = inlined_call_operand.hbm [shape: f32[16,16], index: 3, kind: output, shape index: {}]
  %s4 = sld [smem:[#allocation0]]
  $region22: #{tpu_custom_call.1} parent=0
    _
  %s6 = ssub.s32 1, %s4
  %s7 = scalar_select 0, %s6, %s4
  $region1: #{tpu_custom_call.1} parent=0
    #allocation2 [shape = 'u8[8192]{0}', space=vmem, size = 0x2000, scoped, tag = 'output window, operand 0, single buffered']
    #allocation3 [shape = 's32[1]{0}', space=sflag, size = 0x4, scoped, tag = 'scoped memory for tpu_custom_call.1']
    %8 = vsyncpa [#allocation3], 0
    // Predicated region
    $region2: #{tpu_custom_call.1} parent=1 // pred_check
      _
    $region3: #{tpu_custom_call.1} parent=1 // pred_check_branch
      %10 = sbr.rel (0) target = $region5
    $region4: #{tpu_custom_call.1} parent=1 // pred_region
      _
    $region5: #{tpu_custom_call.1} parent=1 // pred_fallthru
      _
    // Predicated region
    $region6: #{tpu_custom_call.1} parent=1 // pred_check
      _
    $region7: #{tpu_custom_call.1} parent=1 // pred_check_branch
      %12 = sbr.rel (0) target = $region9
    $region8: #{tpu_custom_call.1} parent=1 // pred_region
      _
    $region9: #{tpu_custom_call.1} parent=1 // pred_fallthru
      _
    // Predicated region
    $region10: #{tpu_custom_call.1} parent=1 // pred_check
      _
    $region11: #{tpu_custom_call.1} parent=1 // pred_check_branch
      %14 = sbr.rel (0) target = $region13
    $region12: #{tpu_custom_call.1} parent=1 // pred_region
      _
    $region13: #{tpu_custom_call.1} parent=1 // pred_fallthru
      _
    %v15 = vld [vmem:[%s0] sm:$0xff]
    %v16 = vld [vmem:[%s0 + $0x8] sm:$0xff]
    %v17 = vld [vmem:[%s1] sm:$0xff]
    %v18 = vld [vmem:[%s1 + $0x8] sm:$0xff]
    %v19 = vld [vmem:[%s1 + $0x10] sm:$0xff]
    %v20 = vld [vmem:[%s1 + $0x18] sm:$0xff]
    %v21 = vld [vmem:[%s2] sm:$0x1]
    %v23 = vperm.slane %v21, 0
    %vm25 = vcmask 261120
    %v27 = vsel %vm25, %v15, 0
    %v30 = vsel %vm25, %v16, 0
    %32 = vmatpush.msra.mxu0 0.0
    %33 = vmatpush.msra.mxu0 0.0
    %34 = vmatpush.msra.mxu0 0.0
    %35 = vmatpush.msra.mxu0 0.0
    %36 = vmatpush.msra.mxu0 0.0
    %37 = vmatpush.msra.mxu0 0.0
    %38 = vmatpush.msra.mxu0 0.0
    %39 = vmatpush.msra.mxu0 0.0
    %40 = vmatpush.msra.mxu0 0.0
    %41 = vmatpush.msra.mxu0 0.0
    %42 = vmatpush.msra.mxu0 0.0
    %43 = vmatpush.msra.mxu0 0.0
    %44 = vmatpush.msra.mxu0 %v20
    %45 = vmatpush.msra.mxu0 %v19
    %46 = vmatpush.msra.mxu0 %v18
    %47 = vmatpush.msra.mxu0 %v17
    %48 = vmatmul.f32.gmra.mxu0 %v27
    %v49 = vpop.f32.mrf.mxu0
    %v50 = vadd.f32 %v23, %v49
    %51 = vmatmul.f32.gmra.mxu0 %v30
    %v52 = vpop.f32.mrf.mxu0
    %v53 = vadd.f32 %v23, %v52
    %54 = vdwg.mxu0
    %vm55 = vcmask 130048
    %56 = vst.msk [vmem:[#allocation2] sm:$0xff] %vm55, %v50
    %57 = vst.msk [vmem:[#allocation2 + $0x8] sm:$0xff] %vm55, %v53
    // Predicated region
    $region14: #{tpu_custom_call.1} parent=1 // pred_check
      _
    $region15: #{tpu_custom_call.1} parent=1 // pred_check_branch
      %59 = sbr.rel (0) target = $region17
    $region16: #{tpu_custom_call.1} parent=1 // pred_region
      %61 = vsyncadd [#allocation3], 0
      %s62 = sshll.u32 [#allocation2], 4
      %s63 = int_to_ptr.vmem [resolvable:$true] %s62
      %s64 = sshll.u32 %s3, 4
      %s65 = int_to_ptr.hbm [resolvable:$true] %s64
      %70 = dma.vmem_to_hbm [thread:$0]  %s63, 256, %s65, [#allocation3], 128, 128, 8
    $region17: #{tpu_custom_call.1} parent=1 // pred_fallthru
      _
    // Predicated region
    $region18: #{tpu_custom_call.1} parent=1 // pred_check
      _
    $region19: #{tpu_custom_call.1} parent=1 // pred_check_branch
      %72 = sbr.rel (0) target = $region21
    $region20: #{tpu_custom_call.1} parent=1 // pred_region
      %74 = dma.done [#allocation3], 256
    $region21: #{tpu_custom_call.1} parent=1 // pred_fallthru
      _
    %75 = vsyncpa [#allocation3], 1

</llo_original>
